<compile_context>
chip_gen: v5e
topology: v5e:2x2
jax: 0.10.0
libtpu: 0.0.40
codegen_flags: <defaults>
</compile_context>

<pallas_src>
import functools
import math

import jax
import jax.numpy as jnp
from jax.experimental import pallas as pl
from jax.experimental.pallas import tpu as pltpu


def attention_kernel(q_ref, k_ref, v_ref, wq_ref, wk_ref, wv_ref,
                     bq_ref, bk_ref, bv_ref, ctx_ref, attn_ref,
                     *, scale, neg_inf):
    Bt, K, H = q_ref.shape
    S = k_ref.shape[1]

    # Flatten the batch block into the M (sublane) dimension so each
    # projection is a single wide MXU matmul with f32 accumulation.
    q_in = q_ref[...].reshape(Bt * K, H)
    k_in = k_ref[...].reshape(Bt * S, H)
    v_in = v_ref[...].reshape(Bt * S, H)

    q = jnp.dot(q_in, wq_ref[...], preferred_element_type=jnp.float32) + bq_ref[...]
    k = jnp.dot(k_in, wk_ref[...], preferred_element_type=jnp.float32) + bk_ref[...]
    v = jnp.dot(v_in, wv_ref[...], preferred_element_type=jnp.float32) + bv_ref[...]

    # Fold the 1/sqrt(H) scale into q; cast MXU operands to bf16 (f32 acc,
    # softmax stays f32).  On v5e the MXU still takes bf16; VPU math is f32.
    q3 = (q * scale).reshape(Bt, K, H).astype(jnp.bfloat16)
    k3 = k.reshape(Bt, S, H).astype(jnp.bfloat16)
    v3 = v.reshape(Bt, S, H).astype(jnp.bfloat16)

    # scores[b, j, i] = <q_j, k_i> / sqrt(H)  -> (Bt, K, S), contraction on MXU.
    scores = jnp.einsum('bqh,bkh->bqk', q3, k3,
                        preferred_element_type=jnp.float32)

    # Causal mask as a single select: key position i is visible to query j
    # iff i <= j (matches -1e7 * tril(ones, diagonal=-1) in the PyTorch ref).
    q_idx = jax.lax.broadcasted_iota(jnp.int32, (Bt, K, S), 1)
    k_idx = jax.lax.broadcasted_iota(jnp.int32, (Bt, K, S), 2)
    scores = jnp.where(k_idx > q_idx, neg_inf, scores)

    # Numerically-stable softmax over the key (lane) axis; EUP reciprocal.
    m = jnp.max(scores, axis=-1, keepdims=True)
    e = jnp.exp(scores - m)
    attn = e * pl.reciprocal(jnp.sum(e, axis=-1, keepdims=True), approx=True)

    # context = attn @ v : (Bt, K, S) x (Bt, S, H) -> (Bt, K, H)  (MXU, bf16 in).
    ctx = jnp.einsum('bqk,bkh->bqh', attn.astype(jnp.bfloat16), v3,
                     preferred_element_type=jnp.float32)

    ctx_ref[...] = ctx.astype(ctx_ref.dtype)
    # Fold the (K, S) -> (S, K) permute into the kernel (XLU transpose) so the
    # wrapper needs no separate XLA transpose / extra HBM pass.
    attn_ref[...] = jnp.swapaxes(attn, 1, 2).astype(attn_ref.dtype)


def _pick_batch_block(B, max_block=8):
    """Largest batch block <= max_block that divides B, preferring >= 2 grid
    steps so both v7x TensorCores stay busy under ("parallel",)."""
    divisors = [d for d in range(1, min(B, max_block) + 1) if B % d == 0]
    two_step = [d for d in divisors if B // d >= 2]
    return max(two_step) if two_step else max(divisors)


def causal_scaled_dot_attention(queries, keys, values, wq, bq, wk, bk, wv, bv,
                                *, batch_block=None):
    """Forward pass matching CausalScaledDotAttention.forward.

    queries: (B, K, H) or (B, H); keys/values: (B, S, H).
    Returns: context (B, K, H), attention_weights (B, S, K).
    """
    if queries.ndim == 2:
        queries = queries[:, None, :]
    B, K, H = queries.shape
    S = keys.shape[1]
    scale = float(1.0 / math.sqrt(H))   # rsqrt(hidden_size)

    Bt = _pick_batch_block(B) if batch_block is None else batch_block
    assert B % Bt == 0, "batch_block must divide the batch size"

    kernel = functools.partial(attention_kernel, scale=scale, neg_inf=-1e7)

    ctx, attn = pl.pallas_call(
        kernel,
        out_shape=(jax.ShapeDtypeStruct((B, K, H), jnp.float32),
                   jax.ShapeDtypeStruct((B, S, K), jnp.float32)),
        grid_spec=pltpu.PrefetchScalarGridSpec(
            num_scalar_prefetch=0,
            grid=(B // Bt,),
            in_specs=[
                pl.BlockSpec((Bt, K, H), lambda b: (b, 0, 0)),   # queries block
                pl.BlockSpec((Bt, S, H), lambda b: (b, 0, 0)),   # keys block
                pl.BlockSpec((Bt, S, H), lambda b: (b, 0, 0)),   # values block
                pl.BlockSpec((H, H), lambda b: (0, 0)),          # Wq (grid-invariant)
                pl.BlockSpec((H, H), lambda b: (0, 0)),          # Wk
                pl.BlockSpec((H, H), lambda b: (0, 0)),          # Wv
                pl.BlockSpec((1, H), lambda b: (0, 0)),          # bq
                pl.BlockSpec((1, H), lambda b: (0, 0)),          # bk
                pl.BlockSpec((1, H), lambda b: (0, 0)),          # bv
            ],
            out_specs=[
                pl.BlockSpec((Bt, K, H), lambda b: (b, 0, 0)),   # context block
                pl.BlockSpec((Bt, S, K), lambda b: (b, 0, 0)),   # attn block (S-major)
            ],
        ),
        compiler_params=pltpu.CompilerParams(
            dimension_semantics=("parallel",)),   # batch blocks are independent
    )(queries, keys, values, wq, wk, wv, bq, bk, bv)

    return ctx, attn


def make_params(key, hidden_size):
    """Deterministic synthetic Q/K/V Linear params (PyTorch-style init)."""
    H = hidden_size
    ks = jax.random.split(key, 6)
    bound = 1.0 / math.sqrt(H)

    def lin(kw, kb):
        # PyTorch Linear weight is (out, in); store transposed so y = x @ W + b.
        w = jax.random.uniform(kw, (H, H), jnp.float32, -bound, bound)
        b = jax.random.uniform(kb, (1, H), jnp.float32, -bound, bound)
        return w, b

    wq, bq = lin(ks[0], ks[1])
    wk, bk = lin(ks[2], ks[3])
    wv, bv = lin(ks[4], ks[5])
    return wq, bq, wk, bk, wv, bv


def reference_forward(queries, keys, values, wq, bq, wk, bk, wv, bv):
    """Pure-JAX transcription of the PyTorch forward, for verification."""
    if queries.ndim == 2:
        queries = queries[:, None, :]
    H = queries.shape[-1]
    scale = float(1.0 / math.sqrt(H))
    q = queries @ wq + bq
    k = keys @ wk + bk
    v = values @ wv + bv
    unnorm = jnp.einsum('bsh,bkh->bsk', k, q) * scale          # (B, S, K)
    S, K = unnorm.shape[1], unnorm.shape[2]
    mask = jnp.where(jnp.arange(S)[:, None] > jnp.arange(K)[None, :], -1e7, 0.0)
    attn = jax.nn.softmax(jnp.transpose(unnorm + mask[None], (0, 2, 1)), axis=2)  # (B, K, S)
    context = jnp.einsum('bks,bsh->bkh', attn, v)
    return context, jnp.transpose(attn, (0, 2, 1))             # (B, K, H), (B, S, K)


if __name__ == "__main__":
    hidden_size = 32
    batch_size = 8
    seq_len = 8

    key = jax.random.PRNGKey(0)
    k_par, k_q, k_k, k_v = jax.random.split(key, 4)
    wq, bq, wk, bk, wv, bv = make_params(k_par, hidden_size)

    # Self-attention-style inputs: queries / keys / values all (B, S, H).
    queries = jax.random.normal(k_q, (batch_size, seq_len, hidden_size), jnp.float32)
    keys = jax.random.normal(k_k, (batch_size, seq_len, hidden_size), jnp.float32)
    values = jax.random.normal(k_v, (batch_size, seq_len, hidden_size), jnp.float32)

    fwd = jax.jit(causal_scaled_dot_attention)
    context, attn_w = fwd(queries, keys, values, wq, bq, wk, bk, wv, bv)
    jax.block_until_ready((context, attn_w))

    ctx_ref, attn_ref = reference_forward(queries, keys, values, wq, bq, wk, bk, wv, bv)
    assert context.shape == (batch_size, seq_len, hidden_size)
    assert attn_w.shape == (batch_size, seq_len, seq_len)
    # Tolerances loosened for bf16 MXU operands + approx EUP reciprocal
    # (f32 accumulation / f32 softmax keep errors at the few-1e-3 level).
    assert jnp.allclose(context, ctx_ref, atol=5e-2, rtol=5e-2)
    assert jnp.allclose(attn_w, attn_ref, atol=5e-2, rtol=5e-2)
    # Causality sanity check: attn_w[b, i, j] == 0 whenever key pos i > query pos j
    # (the -1e7 mask underflows exp() to exactly zero in f32).
    strict_lower = jnp.tril(jnp.ones((seq_len, seq_len), jnp.float32), -1)[None]
    assert jnp.all(jnp.abs(attn_w * strict_lower) < 1e-6)

    print("KERNEL_OK")
</pallas_src>

<mosaic_0001>
module attributes {stable_mosaic.version = 11 : i64} {
  func.func @attention_kernel(%arg0: i32, %arg1: memref<4x8x32xf32, #tpu.memory_space<vmem>>, %arg2: memref<4x8x32xf32, #tpu.memory_space<vmem>>, %arg3: memref<4x8x32xf32, #tpu.memory_space<vmem>>, %arg4: memref<32x32xf32, #tpu.memory_space<vmem>>, %arg5: memref<32x32xf32, #tpu.memory_space<vmem>>, %arg6: memref<32x32xf32, #tpu.memory_space<vmem>>, %arg7: memref<1x32xf32, #tpu.memory_space<vmem>>, %arg8: memref<1x32xf32, #tpu.memory_space<vmem>>, %arg9: memref<1x32xf32, #tpu.memory_space<vmem>>, %arg10: memref<4x8x32xf32, #tpu.memory_space<vmem>>, %arg11: memref<4x8x8xf32, #tpu.memory_space<vmem>>) attributes {dimension_semantics = [#tpu.dimension_semantics<parallel>], iteration_bounds = array<i64: 2>, scalar_prefetch = 0 : i64, scratch_operands = 0 : i64, tpu.core_type = #tpu.core_type<tc>, window_params = [{transform_indices = @transform_0, window_bounds = array<i64: 4, 8, 32>}, {transform_indices = @transform_1, window_bounds = array<i64: 4, 8, 32>}, {transform_indices = @transform_2, window_bounds = array<i64: 4, 8, 32>}, {pipeline_mode = #tpu.pipeline_mode<synchronous>, transform_indices = @transform_3, window_bounds = array<i64: 32, 32>}, {pipeline_mode = #tpu.pipeline_mode<synchronous>, transform_indices = @transform_4, window_bounds = array<i64: 32, 32>}, {pipeline_mode = #tpu.pipeline_mode<synchronous>, transform_indices = @transform_5, window_bounds = array<i64: 32, 32>}, {pipeline_mode = #tpu.pipeline_mode<synchronous>, transform_indices = @transform_6, window_bounds = array<i64: 1, 32>}, {pipeline_mode = #tpu.pipeline_mode<synchronous>, transform_indices = @transform_7, window_bounds = array<i64: 1, 32>}, {pipeline_mode = #tpu.pipeline_mode<synchronous>, transform_indices = @transform_8, window_bounds = array<i64: 1, 32>}, {transform_indices = @transform_9, window_bounds = array<i64: 4, 8, 32>}, {transform_indices = @transform_10, window_bounds = array<i64: 4, 8, 8>}]} {
    %c0 = arith.constant 0 : index
    %c0_0 = arith.constant 0 : index
    %c0_1 = arith.constant 0 : index
    %0 = vector.load %arg1[%c0, %c0_0, %c0_1] : memref<4x8x32xf32, #tpu.memory_space<vmem>>, vector<4x8x32xf32>
    %1 = vector.shape_cast %0 : vector<4x8x32xf32> to vector<32x32xf32>
    %c0_2 = arith.constant 0 : index
    %c0_3 = arith.constant 0 : index
    %c0_4 = arith.constant 0 : index
    %2 = vector.load %arg2[%c0_2, %c0_3, %c0_4] : memref<4x8x32xf32, #tpu.memory_space<vmem>>, vector<4x8x32xf32>
    %3 = vector.shape_cast %2 : vector<4x8x32xf32> to vector<32x32xf32>
    %c0_5 = arith.constant 0 : index
    %c0_6 = arith.constant 0 : index
    %c0_7 = arith.constant 0 : index
    %4 = vector.load %arg3[%c0_5, %c0_6, %c0_7] : memref<4x8x32xf32, #tpu.memory_space<vmem>>, vector<4x8x32xf32>
    %5 = vector.shape_cast %4 : vector<4x8x32xf32> to vector<32x32xf32>
    %c0_8 = arith.constant 0 : index
    %c0_9 = arith.constant 0 : index
    %6 = vector.load %arg4[%c0_8, %c0_9] : memref<32x32xf32, #tpu.memory_space<vmem>>, vector<32x32xf32>
    %cst = arith.constant dense<0.000000e+00> : vector<32x32xf32>
    %7 = tpu.matmul %1, %6, %cst {dimension_numbers = #tpu.dot_dimension_numbers<[1], [0], [0], [1], [0, 0, 1, 1], [], []>} : vector<32x32xf32>, vector<32x32xf32>, vector<32x32xf32> -> vector<32x32xf32>
    %c0_10 = arith.constant 0 : index
    %c0_11 = arith.constant 0 : index
    %8 = vector.load %arg7[%c0_10, %c0_11] : memref<1x32xf32, #tpu.memory_space<vmem>>, vector<1x32xf32>
    %9 = vector.broadcast %8 : vector<1x32xf32> to vector<32x32xf32>
    %10 = arith.addf %7, %9 : vector<32x32xf32>
    %c0_12 = arith.constant 0 : index
    %c0_13 = arith.constant 0 : index
    %11 = vector.load %arg5[%c0_12, %c0_13] : memref<32x32xf32, #tpu.memory_space<vmem>>, vector<32x32xf32>
    %cst_14 = arith.constant dense<0.000000e+00> : vector<32x32xf32>
    %12 = tpu.matmul %3, %11, %cst_14 {dimension_numbers = #tpu.dot_dimension_numbers<[1], [0], [0], [1], [0, 0, 1, 1], [], []>} : vector<32x32xf32>, vector<32x32xf32>, vector<32x32xf32> -> vector<32x32xf32>
    %c0_15 = arith.constant 0 : index
    %c0_16 = arith.constant 0 : index
    %13 = vector.load %arg8[%c0_15, %c0_16] : memref<1x32xf32, #tpu.memory_space<vmem>>, vector<1x32xf32>
    %14 = vector.broadcast %13 : vector<1x32xf32> to vector<32x32xf32>
    %15 = arith.addf %12, %14 : vector<32x32xf32>
    %c0_17 = arith.constant 0 : index
    %c0_18 = arith.constant 0 : index
    %16 = vector.load %arg6[%c0_17, %c0_18] : memref<32x32xf32, #tpu.memory_space<vmem>>, vector<32x32xf32>
    %cst_19 = arith.constant dense<0.000000e+00> : vector<32x32xf32>
    %17 = tpu.matmul %5, %16, %cst_19 {dimension_numbers = #tpu.dot_dimension_numbers<[1], [0], [0], [1], [0, 0, 1, 1], [], []>} : vector<32x32xf32>, vector<32x32xf32>, vector<32x32xf32> -> vector<32x32xf32>
    %c0_20 = arith.constant 0 : index
    %c0_21 = arith.constant 0 : index
    %18 = vector.load %arg9[%c0_20, %c0_21] : memref<1x32xf32, #tpu.memory_space<vmem>>, vector<1x32xf32>
    %19 = vector.broadcast %18 : vector<1x32xf32> to vector<32x32xf32>
    %20 = arith.addf %17, %19 : vector<32x32xf32>
    %cst_22 = arith.constant 0.176776692 : f32
    %21 = vector.broadcast %cst_22 : f32 to vector<32x32xf32>
    %22 = arith.mulf %10, %21 : vector<32x32xf32>
    %23 = vector.shape_cast %22 : vector<32x32xf32> to vector<4x8x32xf32>
    %24 = arith.truncf %23 : vector<4x8x32xf32> to vector<4x8x32xbf16>
    %25 = vector.shape_cast %15 : vector<32x32xf32> to vector<4x8x32xf32>
    %26 = arith.truncf %25 : vector<4x8x32xf32> to vector<4x8x32xbf16>
    %27 = vector.shape_cast %20 : vector<32x32xf32> to vector<4x8x32xf32>
    %28 = arith.truncf %27 : vector<4x8x32xf32> to vector<4x8x32xbf16>
    "tpu.trace_start"() <{level = 10 : i32, message = "bqh,bkh->bqk"}> : () -> ()
    %cst_23 = arith.constant dense<0.000000e+00> : vector<4x8x8xf32>
    %29 = tpu.matmul %24, %26, %cst_23 {dimension_numbers = #tpu.dot_dimension_numbers<[2], [2], [1], [1], [0, 0, 0, 1, 1, 1], [0], [0]>} : vector<4x8x32xbf16>, vector<4x8x32xbf16>, vector<4x8x8xf32> -> vector<4x8x8xf32>
    "tpu.trace_stop"() : () -> ()
    %30 = tpu.iota {dimensions = array<i32: 1>} : vector<4x8x8xi32>
    %31 = tpu.iota {dimensions = array<i32: 2>} : vector<4x8x8xi32>
    %32 = arith.cmpi sgt, %31, %30 : vector<4x8x8xi32>
    %cst_24 = arith.constant -1.000000e+07 : f32
    %33 = vector.broadcast %cst_24 : f32 to vector<4x8x8xf32>
    %34 = arith.select %32, %33, %29 : vector<4x8x8xi1>, vector<4x8x8xf32>
    %cst_25 = arith.constant dense<0xFF800000> : vector<4x8xf32>
    %35 = vector.multi_reduction <maximumf>, %34, %cst_25 [2] : vector<4x8x8xf32> to vector<4x8xf32>
    %36 = vector.shape_cast %35 : vector<4x8xf32> to vector<4x8x1xf32>
    %37 = vector.broadcast %36 : vector<4x8x1xf32> to vector<4x8x8xf32>
    %38 = arith.subf %34, %37 : vector<4x8x8xf32>
    %39 = math.exp %38 : vector<4x8x8xf32>
    %cst_26 = arith.constant dense<0.000000e+00> : vector<4x8xf32>
    %40 = vector.multi_reduction <add>, %39, %cst_26 [2] : vector<4x8x8xf32> to vector<4x8xf32>
    %41 = vector.shape_cast %40 : vector<4x8xf32> to vector<4x8x1xf32>
    %42 = tpu.reciprocal %41 {approx = true} : vector<4x8x1xf32> -> vector<4x8x1xf32>
    %43 = vector.broadcast %42 : vector<4x8x1xf32> to vector<4x8x8xf32>
    %44 = arith.mulf %39, %43 : vector<4x8x8xf32>
    %45 = arith.truncf %44 : vector<4x8x8xf32> to vector<4x8x8xbf16>
    "tpu.trace_start"() <{level = 10 : i32, message = "bqk,bkh->bqh"}> : () -> ()
    %cst_27 = arith.constant dense<0.000000e+00> : vector<4x8x32xf32>
    %46 = tpu.matmul %45, %28, %cst_27 {dimension_numbers = #tpu.dot_dimension_numbers<[2], [1], [1], [2], [0, 0, 0, 1, 1, 2], [0], [0]>} : vector<4x8x8xbf16>, vector<4x8x32xbf16>, vector<4x8x32xf32> -> vector<4x8x32xf32>
    "tpu.trace_stop"() : () -> ()
    %c0_28 = arith.constant 0 : index
    %c0_29 = arith.constant 0 : index
    %c0_30 = arith.constant 0 : index
    %47 = vector.load %arg10[%c0_28, %c0_29, %c0_30] : memref<4x8x32xf32, #tpu.memory_space<vmem>>, vector<4x8x32xf32>
    tpu.vector_store %arg10[%c0_28, %c0_29, %c0_30], %46 {strides = array<i32>} : memref<4x8x32xf32, #tpu.memory_space<vmem>>, vector<4x8x32xf32>,
    %48 = tpu.transpose %44, [0, 2, 1] : vector<4x8x8xf32> -> vector<4x8x8xf32>
    %c0_31 = arith.constant 0 : index
    %c0_32 = arith.constant 0 : index
    %c0_33 = arith.constant 0 : index
    %49 = vector.load %arg11[%c0_31, %c0_32, %c0_33] : memref<4x8x8xf32, #tpu.memory_space<vmem>>, vector<4x8x8xf32>
    tpu.vector_store %arg11[%c0_31, %c0_32, %c0_33], %48 {strides = array<i32>} : memref<4x8x8xf32, #tpu.memory_space<vmem>>, vector<4x8x8xf32>,
    return
  }
  func.func @transform_0(%arg0: i32) -> (i32, i32, i32) {
    %c0_i32 = arith.constant 0 : i32
    %c0_i32_0 = arith.constant 0 : i32
    %c0_i32_1 = arith.constant 0 : i32
    return %arg0, %c0_i32, %c0_i32_0 : i32, i32, i32
  }
  func.func @transform_1(%arg0: i32) -> (i32, i32, i32) {
    %c0_i32 = arith.constant 0 : i32
    %c0_i32_0 = arith.constant 0 : i32
    %c0_i32_1 = arith.constant 0 : i32
    return %arg0, %c0_i32, %c0_i32_0 : i32, i32, i32
  }
  func.func @transform_2(%arg0: i32) -> (i32, i32, i32) {
    %c0_i32 = arith.constant 0 : i32
    %c0_i32_0 = arith.constant 0 : i32
    %c0_i32_1 = arith.constant 0 : i32
    return %arg0, %c0_i32, %c0_i32_0 : i32, i32, i32
  }
  func.func @transform_3(%arg0: i32) -> (i32, i32) {
    %c0_i32 = arith.constant 0 : i32
    %c0_i32_0 = arith.constant 0 : i32
    %c0_i32_1 = arith.constant 0 : i32
    return %c0_i32, %c0_i32_0 : i32, i32
  }
  func.func @transform_4(%arg0: i32) -> (i32, i32) {
    %c0_i32 = arith.constant 0 : i32
    %c0_i32_0 = arith.constant 0 : i32
    %c0_i32_1 = arith.constant 0 : i32
    return %c0_i32, %c0_i32_0 : i32, i32
  }
  func.func @transform_5(%arg0: i32) -> (i32, i32) {
    %c0_i32 = arith.constant 0 : i32
    %c0_i32_0 = arith.constant 0 : i32
    %c0_i32_1 = arith.constant 0 : i32
    return %c0_i32, %c0_i32_0 : i32, i32
  }
  func.func @transform_6(%arg0: i32) -> (i32, i32) {
    %c0_i32 = arith.constant 0 : i32
    %c0_i32_0 = arith.constant 0 : i32
    %c0_i32_1 = arith.constant 0 : i32
    return %c0_i32, %c0_i32_0 : i32, i32
  }
  func.func @transform_7(%arg0: i32) -> (i32, i32) {
    %c0_i32 = arith.constant 0 : i32
    %c0_i32_0 = arith.constant 0 : i32
    %c0_i32_1 = arith.constant 0 : i32
    return %c0_i32, %c0_i32_0 : i32, i32
  }
  func.func @transform_8(%arg0: i32) -> (i32, i32) {
    %c0_i32 = arith.constant 0 : i32
    %c0_i32_0 = arith.constant 0 : i32
    %c0_i32_1 = arith.constant 0 : i32
    return %c0_i32, %c0_i32_0 : i32, i32
  }
  func.func @transform_9(%arg0: i32) -> (i32, i32, i32) {
    %c0_i32 = arith.constant 0 : i32
    %c0_i32_0 = arith.constant 0 : i32
    %c0_i32_1 = arith.constant 0 : i32
    return %arg0, %c0_i32, %c0_i32_0 : i32, i32, i32
  }
  func.func @transform_10(%arg0: i32) -> (i32, i32, i32) {
    %c0_i32 = arith.constant 0 : i32
    %c0_i32_0 = arith.constant 0 : i32
    %c0_i32_1 = arith.constant 0 : i32
    return %arg0, %c0_i32, %c0_i32_0 : i32, i32, i32
  }
}

</mosaic_0001>

<llo_original>
// kernel: causal_scaled_dot_attention.1
$region0: #{causal_scaled_dot_attention.1}
  #allocation0 [shape = 'u32[]', space=smem, size = 0x4, offset = 0x4, fixed_abs, tag = 'smem constant byte address 0x4 - core index']
  #allocation1 [shape = 'u32[72,128]{1,0:T(1,128)}', space=vmem, size = 0x9000, scoped, tag = 'internal scratch']
  %s0 = inlined_call_operand.hbm [shape: f32[8,8,32], index: 0, kind: input, shape index: {}]
  %s1 = inlined_call_operand.hbm [shape: f32[8,8,32], index: 1, kind: input, shape index: {}]
  %s2 = inlined_call_operand.hbm [shape: f32[8,8,32], index: 2, kind: input, shape index: {}]
  %s3 = inlined_call_operand.hbm [shape: f32[32,32], index: 3, kind: input, shape index: {}]
  %s4 = inlined_call_operand.hbm [shape: f32[32,32], index: 4, kind: input, shape index: {}]
  %s5 = inlined_call_operand.hbm [shape: f32[32,32], index: 5, kind: input, shape index: {}]
  %s6 = inlined_call_operand.vmem [shape: f32[1,32], index: 6, kind: input, shape index: {}]
  %s7 = inlined_call_operand.vmem [shape: f32[1,32], index: 7, kind: input, shape index: {}]
  %s8 = inlined_call_operand.vmem [shape: f32[1,32], index: 8, kind: input, shape index: {}]
  %s9 = inlined_call_operand.hbm [shape: f32[8,8,32], index: 9, kind: output, shape index: {0}]
  %s10 = inlined_call_operand.hbm [shape: f32[8,8,8], index: 10, kind: output, shape index: {1}]
  %11 = xla_tuple %s9, %s10
  %s12 = sld [smem:[#allocation0]]
  $region101: #{causal_scaled_dot_attention.1} parent=0
    _
  %s14 = ssub.s32 1, %s12
  %s15 = scalar_select 0, %s14, %s12
  $region1: #{causal_scaled_dot_attention.1} parent=0
    #allocation2 [shape = 'u8[32768]{0}', space=vmem, size = 0x8000, scoped, tag = 'input window, operand 0']
    #allocation3 [shape = 's32[2]{0}', space=sflag, size = 0x8, scoped, tag = 'scoped memory for causal_scaled_dot_attention.1']
    #allocation4 [shape = 's32[2]{0}', space=sflag, size = 0x8, scoped, tag = 'scoped memory for causal_scaled_dot_attention.1']
    #allocation5 [shape = 'u8[32768]{0}', space=vmem, size = 0x8000, scoped, tag = 'input window, operand 1']
    #allocation6 [shape = 's32[2]{0}', space=sflag, size = 0x8, scoped, tag = 'scoped memory for causal_scaled_dot_attention.1']
    #allocation7 [shape = 'u8[32768]{0}', space=vmem, size = 0x8000, scoped, tag = 'input window, operand 2']
    #allocation8 [shape = 'u8[16384]{0}', space=vmem, size = 0x4000, scoped, tag = 'input window, operand 3, single buffered']
    #allocation9 [shape = 's32[1]{0}', space=sflag, size = 0x4, scoped, tag = 'scoped memory for causal_scaled_dot_attention.1']
    #allocation10 [shape = 'u8[16384]{0}', space=vmem, size = 0x4000, scoped, tag = 'input window, operand 4, single buffered']
    #allocation11 [shape = 'u8[16384]{0}', space=vmem, size = 0x4000, scoped, tag = 'input window, operand 5, single buffered']
    #allocation12 [shape = 's32[1]{0}', space=sflag, size = 0x4, scoped, tag = 'scoped memory for causal_scaled_dot_attention.1']
    #allocation13 [shape = 'u8[32768]{0}', space=vmem, size = 0x8000, scoped, tag = 'output window, operand 0']
    #allocation14 [shape = 'u8[32768]{0}', space=vmem, size = 0x8000, scoped, tag = 'output window, operand 1']
    #allocation15 [shape = 's32[2]{0}', space=sflag, size = 0x8, scoped, tag = 'scoped memory for causal_scaled_dot_attention.1']
    %16 = vsyncpa [#allocation3], 0
    %s17 = scalar_lea.sflag [#allocation3], 1
    %18 = vsyncpa %s17, 0
    %19 = vsyncpa [#allocation6], 0
    %s20 = scalar_lea.sflag [#allocation6], 1
    %21 = vsyncpa %s20, 0
    %22 = vsyncpa [#allocation9], 0
    %23 = vsyncpa [#allocation12], 0
    %24 = vsyncpa [#allocation4], 0
    %s25 = scalar_lea.sflag [#allocation4], 1
    %26 = vsyncpa %s25, 0
    %27 = vsyncpa [#allocation15], 0
    %s28 = scalar_lea.sflag [#allocation15], 1
    %29 = vsyncpa %s28, 0
    loop: start=0, step=1, limit=4
    $region2: #{causal_scaled_dot_attention.1} parent=1 // loop_pre_header
      _
    $region3: #{causal_scaled_dot_attention.1} parent=1 // loop_header
      %s31 = sphi 0, %s35
      %p32 = scmp.ge.s32.totalorder %s31, 4
      %s41 = sphi 0, %s43
      %s44 = sphi 0, %s41
      %s45 = sphi 0, %s44
      %s61 = sphi 0, %s45
      %s67 = sphi 0, %s69
      %s70 = sphi 0, %s67
      %s71 = sphi 0, %s70
      %s87 = sphi 0, %s71
      %s93 = sphi 0, %s95
      %s96 = sphi 0, %s93
      %s97 = sphi 0, %s96
      %s113 = sphi 0, %s97
      %s117 = sphi 0, %s117
      %s119 = sphi 0, %s117
      %s120 = sphi 0, %s119
      %s134 = sphi 0, %s120
      %s138 = sphi 0, %s138
      %s140 = sphi 0, %s138
      %s141 = sphi 0, %s140
      %s155 = sphi 0, %s141
      %s159 = sphi 0, %s159
      %s161 = sphi 0, %s159
      %s162 = sphi 0, %s161
      %s176 = sphi 0, %s162
      %s180 = sphi 0, %s180
      %s182 = sphi 0, %s180
      %s183 = sphi 0, %s182
      %s197 = sphi 0, %s183
      %s201 = sphi 0, %s201
      %s203 = sphi 0, %s201
      %s204 = sphi 0, %s203
      %s218 = sphi 0, %s204
      %s222 = sphi 0, %s222
      %s224 = sphi 0, %s222
      %s225 = sphi 0, %s224
      %s239 = sphi 0, %s225
      %s245 = sphi 0, %s247
      %s248 = sphi 0, %s245
      %s249 = sphi 0, %s248
      %s265 = sphi 0, %s249
      %s271 = sphi 0, %s273
      %s274 = sphi 0, %s271
      %s275 = sphi 0, %s274
      %s291 = sphi 0, %s275
    $region4: #{causal_scaled_dot_attention.1} parent=1 // loop_header_branch
      %34 = sbr.rel (%p32) target = $region8
    $region5: #{causal_scaled_dot_attention.1} parent=1 // loop_body
      %s36 = ssub.s32 %s31, 1
      %s37 = ssub.s32 %s31, 2
      %s38 = sadd.s32 %s31, 1
      %s39 = ssub.s32 %s31, %s38
      %p40 = scmp.eq.s32.totalorder %s39, 0
      %s42 = sadd.s32 %s41, 1
      %s43 = scalar_select %p40, %s41, %s42
      %p46 = pneg %p40
      %p47 = scmp.eq.s32.totalorder %s31, 1
      %p48 = por %p46, %p47
      %p49 = scmp.ne.s32.totalorder %s41, %s44
      %p50 = scmp.eq.s32.totalorder %s31, 0
      %p51 = por %p49, %p50
      %p52 = scmp.ne.s32.totalorder %s41, %s44
      %p53 = scmp.eq.s32.totalorder %s36, 1
      %p54 = por %p52, %p53
      %p55 = scmp.ne.s32.totalorder %s44, %s45
      %p56 = scmp.eq.s32.totalorder %s36, 0
      %p57 = por %p55, %p56
      %p58 = scmp.ne.s32.totalorder %s44, %s45
      %p59 = scmp.eq.s32.totalorder %s37, 1
      %p60 = por %p58, %p59
      %p62 = scmp.ne.s32.totalorder %s45, %s61
      %p63 = scmp.eq.s32.totalorder %s37, 0
      %p64 = por %p62, %p63
      %s65 = ssub.s32 %s31, %s38
      %p66 = scmp.eq.s32.totalorder %s65, 0
      %s68 = sadd.s32 %s67, 1
      %s69 = scalar_select %p66, %s67, %s68
      %p72 = pneg %p66
      %p73 = scmp.eq.s32.totalorder %s31, 1
      %p74 = por %p72, %p73
      %p75 = scmp.ne.s32.totalorder %s67, %s70
      %p76 = scmp.eq.s32.totalorder %s31, 0
      %p77 = por %p75, %p76
      %p78 = scmp.ne.s32.totalorder %s67, %s70
      %p79 = scmp.eq.s32.totalorder %s36, 1
      %p80 = por %p78, %p79
      %p81 = scmp.ne.s32.totalorder %s70, %s71
      %p82 = scmp.eq.s32.totalorder %s36, 0
      %p83 = por %p81, %p82
      %p84 = scmp.ne.s32.totalorder %s70, %s71
      %p85 = scmp.eq.s32.totalorder %s37, 1
      %p86 = por %p84, %p85
      %p88 = scmp.ne.s32.totalorder %s71, %s87
      %p89 = scmp.eq.s32.totalorder %s37, 0
      %p90 = por %p88, %p89
      %s91 = ssub.s32 %s31, %s38
      %p92 = scmp.eq.s32.totalorder %s91, 0
      %s94 = sadd.s32 %s93, 1
      %s95 = scalar_select %p92, %s93, %s94
      %p98 = pneg %p92
      %p99 = scmp.eq.s32.totalorder %s31, 1
      %p100 = por %p98, %p99
      %p101 = scmp.ne.s32.totalorder %s93, %s96
      %p102 = scmp.eq.s32.totalorder %s31, 0
      %p103 = por %p101, %p102
      %p104 = scmp.ne.s32.totalorder %s93, %s96
      %p105 = scmp.eq.s32.totalorder %s36, 1
      %p106 = por %p104, %p105
      %p107 = scmp.ne.s32.totalorder %s96, %s97
      %p108 = scmp.eq.s32.totalorder %s36, 0
      %p109 = por %p107, %p108
      %p110 = scmp.ne.s32.totalorder %s96, %s97
      %p111 = scmp.eq.s32.totalorder %s37, 1
      %p112 = por %p110, %p111
      %p114 = scmp.ne.s32.totalorder %s97, %s113
      %p115 = scmp.eq.s32.totalorder %s37, 0
      %p116 = por %p114, %p115
      %s118 = sadd.s32 %s117, 1
      %p121 = scmp.eq.s32.totalorder %s31, 1
      %p122 = scmp.ne.s32.totalorder %s117, %s119
      %p123 = scmp.eq.s32.totalorder %s31, 0
      %p124 = por %p122, %p123
      %p125 = scmp.ne.s32.totalorder %s117, %s119
      %p126 = scmp.eq.s32.totalorder %s36, 1
      %p127 = por %p125, %p126
      %p128 = scmp.ne.s32.totalorder %s119, %s120
      %p129 = scmp.eq.s32.totalorder %s36, 0
      %p130 = por %p128, %p129
      %p131 = scmp.ne.s32.totalorder %s119, %s120
      %p132 = scmp.eq.s32.totalorder %s37, 1
      %p133 = por %p131, %p132
      %p135 = scmp.ne.s32.totalorder %s120, %s134
      %p136 = scmp.eq.s32.totalorder %s37, 0
      %p137 = por %p135, %p136
      %s139 = sadd.s32 %s138, 1
      %p142 = scmp.eq.s32.totalorder %s31, 1
      %p143 = scmp.ne.s32.totalorder %s138, %s140
      %p144 = scmp.eq.s32.totalorder %s31, 0
      %p145 = por %p143, %p144
      %p146 = scmp.ne.s32.totalorder %s138, %s140
      %p147 = scmp.eq.s32.totalorder %s36, 1
      %p148 = por %p146, %p147
      %p149 = scmp.ne.s32.totalorder %s140, %s141
      %p150 = scmp.eq.s32.totalorder %s36, 0
      %p151 = por %p149, %p150
      %p152 = scmp.ne.s32.totalorder %s140, %s141
      %p153 = scmp.eq.s32.totalorder %s37, 1
      %p154 = por %p152, %p153
      %p156 = scmp.ne.s32.totalorder %s141, %s155
      %p157 = scmp.eq.s32.totalorder %s37, 0
      %p158 = por %p156, %p157
      %s160 = sadd.s32 %s159, 1
      %p163 = scmp.eq.s32.totalorder %s31, 1
      %p164 = scmp.ne.s32.totalorder %s159, %s161
      %p165 = scmp.eq.s32.totalorder %s31, 0
      %p166 = por %p164, %p165
      %p167 = scmp.ne.s32.totalorder %s159, %s161
      %p168 = scmp.eq.s32.totalorder %s36, 1
      %p169 = por %p167, %p168
      %p170 = scmp.ne.s32.totalorder %s161, %s162
      %p171 = scmp.eq.s32.totalorder %s36, 0
      %p172 = por %p170, %p171
      %p173 = scmp.ne.s32.totalorder %s161, %s162
      %p174 = scmp.eq.s32.totalorder %s37, 1
      %p175 = por %p173, %p174
      %p177 = scmp.ne.s32.totalorder %s162, %s176
      %p178 = scmp.eq.s32.totalorder %s37, 0
      %p179 = por %p177, %p178
      %s181 = sadd.s32 %s180, 1
      %p184 = scmp.eq.s32.totalorder %s31, 1
      %p185 = scmp.ne.s32.totalorder %s180, %s182
      %p186 = scmp.eq.s32.totalorder %s31, 0
      %p187 = por %p185, %p186
      %p188 = scmp.ne.s32.totalorder %s180, %s182
      %p189 = scmp.eq.s32.totalorder %s36, 1
      %p190 = por %p188, %p189
      %p191 = scmp.ne.s32.totalorder %s182, %s183
      %p192 = scmp.eq.s32.totalorder %s36, 0
      %p193 = por %p191, %p192
      %p194 = scmp.ne.s32.totalorder %s182, %s183
      %p195 = scmp.eq.s32.totalorder %s37, 1
      %p196 = por %p194, %p195
      %p198 = scmp.ne.s32.totalorder %s183, %s197
      %p199 = scmp.eq.s32.totalorder %s37, 0
      %p200 = por %p198, %p199
      %s202 = sadd.s32 %s201, 1
      %p205 = scmp.eq.s32.totalorder %s31, 1
      %p206 = scmp.ne.s32.totalorder %s201, %s203
      %p207 = scmp.eq.s32.totalorder %s31, 0
      %p208 = por %p206, %p207
      %p209 = scmp.ne.s32.totalorder %s201, %s203
      %p210 = scmp.eq.s32.totalorder %s36, 1
      %p211 = por %p209, %p210
      %p212 = scmp.ne.s32.totalorder %s203, %s204
      %p213 = scmp.eq.s32.totalorder %s36, 0
      %p214 = por %p212, %p213
      %p215 = scmp.ne.s32.totalorder %s203, %s204
      %p216 = scmp.eq.s32.totalorder %s37, 1
      %p217 = por %p215, %p216
      %p219 = scmp.ne.s32.totalorder %s204, %s218
      %p220 = scmp.eq.s32.totalorder %s37, 0
      %p221 = por %p219, %p220
      %s223 = sadd.s32 %s222, 1
      %p226 = scmp.eq.s32.totalorder %s31, 1
      %p227 = scmp.ne.s32.totalorder %s222, %s224
      %p228 = scmp.eq.s32.totalorder %s31, 0
      %p229 = por %p227, %p228
      %p230 = scmp.ne.s32.totalorder %s222, %s224
      %p231 = scmp.eq.s32.totalorder %s36, 1
      %p232 = por %p230, %p231
      %p233 = scmp.ne.s32.totalorder %s224, %s225
      %p234 = scmp.eq.s32.totalorder %s36, 0
      %p235 = por %p233, %p234
      %p236 = scmp.ne.s32.totalorder %s224, %s225
      %p237 = scmp.eq.s32.totalorder %s37, 1
      %p238 = por %p236, %p237
      %p240 = scmp.ne.s32.totalorder %s225, %s239
      %p241 = scmp.eq.s32.totalorder %s37, 0
      %p242 = por %p240, %p241
      %s243 = ssub.s32 %s31, %s38
      %p244 = scmp.eq.s32.totalorder %s243, 0
      %s246 = sadd.s32 %s245, 1
      %s247 = scalar_select %p244, %s245, %s246
      %p250 = pneg %p244
      %p251 = scmp.eq.s32.totalorder %s31, 1
      %p252 = por %p250, %p251
      %p253 = scmp.ne.s32.totalorder %s245, %s248
      %p254 = scmp.eq.s32.totalorder %s31, 0
      %p255 = por %p253, %p254
      %p256 = scmp.ne.s32.totalorder %s245, %s248
      %p257 = scmp.eq.s32.totalorder %s36, 1
      %p258 = por %p256, %p257
      %p259 = scmp.ne.s32.totalorder %s248, %s249
      %p260 = scmp.eq.s32.totalorder %s36, 0
      %p261 = por %p259, %p260
      %p262 = scmp.ne.s32.totalorder %s248, %s249
      %p263 = scmp.eq.s32.totalorder %s37, 1
      %p264 = por %p262, %p263
      %p266 = scmp.ne.s32.totalorder %s249, %s265
      %p267 = scmp.eq.s32.totalorder %s37, 0
      %p268 = por %p266, %p267
      %s269 = ssub.s32 %s31, %s38
      %p270 = scmp.eq.s32.totalorder %s269, 0
      %s272 = sadd.s32 %s271, 1
      %s273 = scalar_select %p270, %s271, %s272
      %p276 = pneg %p270
      %p277 = scmp.eq.s32.totalorder %s31, 1
      %p278 = por %p276, %p277
      %p279 = scmp.ne.s32.totalorder %s271, %s274
      %p280 = scmp.eq.s32.totalorder %s31, 0
      %p281 = por %p279, %p280
      %p282 = scmp.ne.s32.totalorder %s271, %s274
      %p283 = scmp.eq.s32.totalorder %s36, 1
      %p284 = por %p282, %p283
      %p285 = scmp.ne.s32.totalorder %s274, %s275
      %p286 = scmp.eq.s32.totalorder %s36, 0
      %p287 = por %p285, %p286
      %p288 = scmp.ne.s32.totalorder %s274, %s275
      %p289 = scmp.eq.s32.totalorder %s37, 1
      %p290 = por %p288, %p289
      %p292 = scmp.ne.s32.totalorder %s275, %s291
      %p293 = scmp.eq.s32.totalorder %s37, 0
      %p294 = por %p292, %p293
      %p295 = scmp.le.s32.totalorder 1, %s31
      %p296 = scmp.lt.s32.totalorder %s31, 3
      %p297 = pnand %p295, %p296
      %p298 = pneg %p297
      // Predicated region
      $region9: #{causal_scaled_dot_attention.1} parent=5 // pred_check
        _
      $region10: #{causal_scaled_dot_attention.1} parent=5 // pred_check_branch
        %300 = sbr.rel (%p297) target = $region12
      $region11: #{causal_scaled_dot_attention.1} parent=5 // pred_region
        %s301 = ssub.s32 %s31, 1
        // Predicated region
        $region13: #{causal_scaled_dot_attention.1} parent=11 // pred_check
          %p302 = pneg %p130
        $region14: #{causal_scaled_dot_attention.1} parent=11 // pred_check_branch
          %304 = sbr.rel (%p302) target = $region16
        $region15: #{causal_scaled_dot_attention.1} parent=11 // pred_region
          %306 = vsyncadd [#allocation9], 0
          %s307 = sshll.u32 %s3, 4
          %s308 = int_to_ptr.hbm [resolvable:$true] %s307
          %s309 = sshll.u32 [#allocation8], 4
          %s310 = int_to_ptr.vmem [resolvable:$true] %s309
          %315 = dma.hbm_to_vmem [thread:$0]  %s308, 512, %s310, [#allocation9], 128, 128, 8
        $region16: #{causal_scaled_dot_attention.1} parent=11 // pred_fallthru
          _
        // Predicated region
        $region17: #{causal_scaled_dot_attention.1} parent=11 // pred_check
          %p316 = pneg %p151
        $region18: #{causal_scaled_dot_attention.1} parent=11 // pred_check_branch
          %318 = sbr.rel (%p316) target = $region20
        $region19: #{causal_scaled_dot_attention.1} parent=11 // pred_region
          %320 = vsyncadd [#allocation9], 0
          %s321 = sshll.u32 %s4, 4
          %s322 = int_to_ptr.hbm [resolvable:$true] %s321
          %s323 = sshll.u32 [#allocation10], 4
          %s324 = int_to_ptr.vmem [resolvable:$true] %s323
          %329 = dma.hbm_to_vmem [thread:$0]  %s322, 512, %s324, [#allocation9], 128, 128, 8
        $region20: #{causal_scaled_dot_attention.1} parent=11 // pred_fallthru
          _
        // Predicated region
        $region21: #{causal_scaled_dot_attention.1} parent=11 // pred_check
          %p330 = pneg %p172
        $region22: #{causal_scaled_dot_attention.1} parent=11 // pred_check_branch
          %332 = sbr.rel (%p330) target = $region24
        $region23: #{causal_scaled_dot_attention.1} parent=11 // pred_region
          %334 = vsyncadd [#allocation12], 0
          %s335 = sshll.u32 %s5, 4
          %s336 = int_to_ptr.hbm [resolvable:$true] %s335
          %s337 = sshll.u32 [#allocation11], 4
          %s338 = int_to_ptr.vmem [resolvable:$true] %s337
          %343 = dma.hbm_to_vmem [thread:$0]  %s336, 512, %s338, [#allocation12], 128, 128, 8
        $region24: #{causal_scaled_dot_attention.1} parent=11 // pred_fallthru
          _
        // Predicated region
        $region25: #{causal_scaled_dot_attention.1} parent=11 // pred_check
          %p344 = pneg %p193
        $region26: #{causal_scaled_dot_attention.1} parent=11 // pred_check_branch
          %346 = sbr.rel (%p344) target = $region28
        $region27: #{causal_scaled_dot_attention.1} parent=11 // pred_region
          _
        $region28: #{causal_scaled_dot_attention.1} parent=11 // pred_fallthru
          _
        // Predicated region
        $region29: #{causal_scaled_dot_attention.1} parent=11 // pred_check
          %p347 = pneg %p214
        $region30: #{causal_scaled_dot_attention.1} parent=11 // pred_check_branch
          %349 = sbr.rel (%p347) target = $region32
        $region31: #{causal_scaled_dot_attention.1} parent=11 // pred_region
          _
        $region32: #{causal_scaled_dot_attention.1} parent=11 // pred_fallthru
          _
        // Predicated region
        $region33: #{causal_scaled_dot_attention.1} parent=11 // pred_check
          %p350 = pneg %p235
        $region34: #{causal_scaled_dot_attention.1} parent=11 // pred_check_branch
          %352 = sbr.rel (%p350) target = $region36
        $region35: #{causal_scaled_dot_attention.1} parent=11 // pred_region
          _
        $region36: #{causal_scaled_dot_attention.1} parent=11 // pred_fallthru
          _
      $region12: #{causal_scaled_dot_attention.1} parent=5 // pred_fallthru
        _
      %p353 = scmp.lt.s32.totalorder %s31, 2
      // Predicated region
      $region37: #{causal_scaled_dot_attention.1} parent=5 // pred_check
        %p354 = pneg %p353
      $region38: #{causal_scaled_dot_attention.1} parent=5 // pred_check_branch
        %356 = sbr.rel (%p354) target = $region40
      $region39: #{causal_scaled_dot_attention.1} parent=5 // pred_region
        // Predicated region
        $region41: #{causal_scaled_dot_attention.1} parent=39 // pred_check
          %p357 = pneg %p51
        $region42: #{causal_scaled_dot_attention.1} parent=39 // pred_check_branch
          %359 = sbr.rel (%p357) target = $region44
        $region43: #{causal_scaled_dot_attention.1} parent=39 // pred_region
          %s360 = sand.u32 %s41, 1
          %s361 = scalar_lea.sflag [#allocation3], %s360
          %s362 = sand.u32 %s41, 1
          %s363 = smul.addr %s362, 32
          %s364 = scalar_lea.vmem [#allocation2], %s363
          %s365 = smul.u32 4, %s31
          %367 = vsyncadd %s361, 0
          %s368 = smul.addr %s365, 8
          %s369 = scalar_lea.hbm %s0, %s368
          %s370 = sshll.u32 %s369, 4
          %s371 = int_to_ptr.hbm [resolvable:$true] %s370
          %s372 = sshll.u32 %s364, 4
          %s373 = int_to_ptr.vmem [resolvable:$true] %s372
          %378 = dma.hbm_to_vmem [thread:$0]  %s371, 512, %s373, %s361, 128, 128, 8
        $region44: #{causal_scaled_dot_attention.1} parent=39 // pred_fallthru
          _
        // Predicated region
        $region45: #{causal_scaled_dot_attention.1} parent=39 // pred_check
          %p379 = pneg %p77
        $region46: #{causal_scaled_dot_attention.1} parent=39 // pred_check_branch
          %381 = sbr.rel (%p379) target = $region48
        $region47: #{causal_scaled_dot_attention.1} parent=39 // pred_region
          %s382 = sand.u32 %s31, 1
          %s383 = scalar_lea.sflag [#allocation6], %s382
          %s384 = sand.u32 %s67, 1
          %s385 = smul.addr %s384, 32
          %s386 = scalar_lea.vmem [#allocation5], %s385
          %s387 = smul.u32 4, %s31
          %389 = vsyncadd %s383, 0
          %s390 = smul.addr %s387, 8
          %s391 = scalar_lea.hbm %s1, %s390
          %s392 = sshll.u32 %s391, 4
          %s393 = int_to_ptr.hbm [resolvable:$true] %s392
          %s394 = sshll.u32 %s386, 4
          %s395 = int_to_ptr.vmem [resolvable:$true] %s394
          %400 = dma.hbm_to_vmem [thread:$0]  %s393, 512, %s395, %s383, 128, 128, 8
        $region48: #{causal_scaled_dot_attention.1} parent=39 // pred_fallthru
          _
        // Predicated region
        $region49: #{causal_scaled_dot_attention.1} parent=39 // pred_check
          %p401 = pneg %p103
        $region50: #{causal_scaled_dot_attention.1} parent=39 // pred_check_branch
          %403 = sbr.rel (%p401) target = $region52
        $region51: #{causal_scaled_dot_attention.1} parent=39 // pred_region
          %s404 = sand.u32 %s31, 1
          %s405 = scalar_lea.sflag [#allocation6], %s404
          %s406 = sand.u32 %s93, 1
          %s407 = smul.addr %s406, 32
          %s408 = scalar_lea.vmem [#allocation7], %s407
          %s409 = smul.u32 4, %s31
          %411 = vsyncadd %s405, 0
          %s412 = smul.addr %s409, 8
          %s413 = scalar_lea.hbm %s2, %s412
          %s414 = sshll.u32 %s413, 4
          %s415 = int_to_ptr.hbm [resolvable:$true] %s414
          %s416 = sshll.u32 %s408, 4
          %s417 = int_to_ptr.vmem [resolvable:$true] %s416
          %422 = dma.hbm_to_vmem [thread:$0]  %s415, 512, %s417, %s405, 128, 128, 8
        $region52: #{causal_scaled_dot_attention.1} parent=39 // pred_fallthru
          _
      $region40: #{causal_scaled_dot_attention.1} parent=5 // pred_fallthru
        _
      %p423 = scmp.le.s32.totalorder 1, %s31
      %p424 = scmp.lt.s32.totalorder %s31, 3
      %p425 = pnand %p423, %p424
      %p426 = pneg %p425
      // Predicated region
      $region53: #{causal_scaled_dot_attention.1} parent=5 // pred_check
        _
      $region54: #{causal_scaled_dot_attention.1} parent=5 // pred_check_branch
        %428 = sbr.rel (%p425) target = $region56
      $region55: #{causal_scaled_dot_attention.1} parent=5 // pred_region
        %s429 = ssub.s32 %s31, 1
        %s430 = sand.u32 %s44, 1
        %s431 = scalar_lea.sflag [#allocation3], %s430
        %s432 = sand.u32 %s44, 1
        %s433 = smul.addr %s432, 32
        %s434 = scalar_lea.vmem [#allocation2], %s433
        // Predicated region
        $region57: #{causal_scaled_dot_attention.1} parent=55 // pred_check
          %p435 = pneg %p57
        $region58: #{causal_scaled_dot_attention.1} parent=55 // pred_check_branch
          %437 = sbr.rel (%p435) target = $region60
        $region59: #{causal_scaled_dot_attention.1} parent=55 // pred_region
          %439 = dma.done %s431, 512
        $region60: #{causal_scaled_dot_attention.1} parent=55 // pred_fallthru
          _
        %s440 = sand.u32 %s36, 1
        %s441 = scalar_lea.sflag [#allocation6], %s440
        %s442 = sand.u32 %s70, 1
        %s443 = smul.addr %s442, 32
        %s444 = scalar_lea.vmem [#allocation5], %s443
        // Predicated region
        $region61: #{causal_scaled_dot_attention.1} parent=55 // pred_check
          %p445 = pneg %p83
        $region62: #{causal_scaled_dot_attention.1} parent=55 // pred_check_branch
          %447 = sbr.rel (%p445) target = $region64
        $region63: #{causal_scaled_dot_attention.1} parent=55 // pred_region
          %449 = dma.done %s441, 512
        $region64: #{causal_scaled_dot_attention.1} parent=55 // pred_fallthru
          _
        %s450 = sand.u32 %s36, 1
        %s451 = scalar_lea.sflag [#allocation6], %s450
        %s452 = sand.u32 %s96, 1
        %s453 = smul.addr %s452, 32
        %s454 = scalar_lea.vmem [#allocation7], %s453
        // Predicated region
        $region65: #{causal_scaled_dot_attention.1} parent=55 // pred_check
          %p455 = pneg %p109
        $region66: #{causal_scaled_dot_attention.1} parent=55 // pred_check_branch
          %457 = sbr.rel (%p455) target = $region68
        $region67: #{causal_scaled_dot_attention.1} parent=55 // pred_region
          %459 = dma.done %s451, 512
        $region68: #{causal_scaled_dot_attention.1} parent=55 // pred_fallthru
          _
        // Predicated region
        $region69: #{causal_scaled_dot_attention.1} parent=55 // pred_check
          %p460 = pneg %p130
        $region70: #{causal_scaled_dot_attention.1} parent=55 // pred_check_branch
          %462 = sbr.rel (%p460) target = $region72
        $region71: #{causal_scaled_dot_attention.1} parent=55 // pred_region
          %464 = dma.done [#allocation9], 512
        $region72: #{causal_scaled_dot_attention.1} parent=55 // pred_fallthru
          _
        // Predicated region
        $region73: #{causal_scaled_dot_attention.1} parent=55 // pred_check
          %p465 = pneg %p151
        $region74: #{causal_scaled_dot_attention.1} parent=55 // pred_check_branch
          %467 = sbr.rel (%p465) target = $region76
        $region75: #{causal_scaled_dot_attention.1} parent=55 // pred_region
          %469 = dma.done [#allocation9], 512
        $region76: #{causal_scaled_dot_attention.1} parent=55 // pred_fallthru
          _
        // Predicated region
        $region77: #{causal_scaled_dot_attention.1} parent=55 // pred_check
          %p470 = pneg %p172
        $region78: #{causal_scaled_dot_attention.1} parent=55 // pred_check_branch
          %472 = sbr.rel (%p470) target = $region80
        $region79: #{causal_scaled_dot_attention.1} parent=55 // pred_region
          %474 = dma.done [#allocation12], 512
        $region80: #{causal_scaled_dot_attention.1} parent=55 // pred_fallthru
          _
        %s475 = sand.u32 %s44, 1
        %s476 = scalar_lea.sflag [#allocation3], %s475
        %s477 = sand.u32 %s44, 1
        %s478 = smul.addr %s477, 32
        %s479 = scalar_lea.vmem [#allocation2], %s478
        %p480 = pneg %p57
        %p481 = pneg %p54
        %s482 = sand.u32 %s36, 1
        %s483 = scalar_lea.sflag [#allocation6], %s482
        %s484 = sand.u32 %s70, 1
        %s485 = smul.addr %s484, 32
        %s486 = scalar_lea.vmem [#allocation5], %s485
        %p487 = pneg %p83
        %p488 = pneg %p80
        %s489 = sand.u32 %s36, 1
        %s490 = scalar_lea.sflag [#allocation6], %s489
        %s491 = sand.u32 %s96, 1
        %s492 = smul.addr %s491, 32
        %s493 = scalar_lea.vmem [#allocation7], %s492
        %p494 = pneg %p109
        %p495 = pneg %p106
        %p496 = pneg %p130
        %p497 = pneg %p127
        %p498 = pneg %p151
        %p499 = pneg %p148
        %p500 = pneg %p172
        %p501 = pneg %p169
        %p502 = pneg %p193
        %p503 = pneg %p190
        %p504 = pneg %p214
        %p505 = pneg %p211
        %p506 = pneg %p235
        %p507 = pneg %p232
        %p508 = pneg %p261
        %p509 = pneg %p258
        %s510 = sand.u32 %s248, 1
        %s511 = scalar_lea.sflag [#allocation4], %s510
        %s512 = sand.u32 %s248, 1
        %s513 = smul.addr %s512, 32
        %s514 = scalar_lea.vmem [#allocation13], %s513
        %p515 = pneg %p287
        %p516 = pneg %p284
        %s517 = sand.u32 %s274, 1
        %s518 = scalar_lea.sflag [#allocation15], %s517
        %s519 = sand.u32 %s274, 1
        %s520 = smul.addr %s519, 32
        %s521 = scalar_lea.vmem [#allocation14], %s520
        %s522 = smul.u32 4, %s36
        %s523 = smul.u32 4, %s36
        %s524 = smul.u32 4, %s36
        %s525 = smul.u32 4, %s36
        %s526 = smul.u32 4, %s36
        %v528 = vld [vmem:[%s434] sm:$0xff]
        %v529 = vld [vmem:[%s434 + $0x8] sm:$0xff]
        %v530 = vld [vmem:[%s434 + $0x10] sm:$0xff]
        %v531 = vld [vmem:[%s434 + $0x18] sm:$0xff]
        %v532 = vld [vmem:[%s444] sm:$0xff]
        %v533 = vld [vmem:[%s444 + $0x8] sm:$0xff]
        %v534 = vld [vmem:[%s444 + $0x10] sm:$0xff]
        %v535 = vld [vmem:[%s444 + $0x18] sm:$0xff]
        %v536 = vld [vmem:[%s454] sm:$0xff]
        %v537 = vld [vmem:[%s454 + $0x8] sm:$0xff]
        %v538 = vld [vmem:[%s454 + $0x10] sm:$0xff]
        %v539 = vld [vmem:[%s454 + $0x18] sm:$0xff]
        %v540 = vld [vmem:[#allocation8] sm:$0xff]
        %v541 = vld [vmem:[#allocation8 + $0x8] sm:$0xff]
        %v542 = vld [vmem:[#allocation8 + $0x10] sm:$0xff]
        %v543 = vld [vmem:[#allocation8 + $0x18] sm:$0xff]
        %v544 = vld [vmem:[%s6] sm:$0x1]
        %v546 = vperm.slane %v544, 0
        %vm548 = vcmask 261120
        %v550 = vsel %vm548, %v528, 0
        %v553 = vsel %vm548, %v529, 0
        %v556 = vsel %vm548, %v530, 0
        %v559 = vsel %vm548, %v531, 0
        %561 = vmatpush.msra.mxu0 0.0
        %562 = vmatpush.msra.mxu0 0.0
        %563 = vmatpush.msra.mxu0 0.0
        %564 = vmatpush.msra.mxu0 0.0
        %565 = vmatpush.msra.mxu0 0.0
        %566 = vmatpush.msra.mxu0 0.0
        %567 = vmatpush.msra.mxu0 0.0
        %568 = vmatpush.msra.mxu0 0.0
        %569 = vmatpush.msra.mxu0 0.0
        %570 = vmatpush.msra.mxu0 0.0
        %571 = vmatpush.msra.mxu0 0.0
        %572 = vmatpush.msra.mxu0 0.0
        %573 = vmatpush.msra.mxu0 %v543
        %574 = vmatpush.msra.mxu0 %v542
        %575 = vmatpush.msra.mxu0 %v541
        %576 = vmatpush.msra.mxu0 %v540
        %577 = vmatmul.f32.gmra.mxu0 %v550
        %v578 = vpop.f32.mrf.mxu0
        %v579 = vadd.f32 %v546, %v578
        %580 = vmatmul.f32.gmra.mxu0 %v553
        %v581 = vpop.f32.mrf.mxu0
        %v582 = vadd.f32 %v546, %v581
        %583 = vmatmul.f32.gmra.mxu0 %v556
        %v584 = vpop.f32.mrf.mxu0
        %v585 = vadd.f32 %v546, %v584
        %586 = vmatmul.f32.gmra.mxu0 %v559
        %v587 = vpop.f32.mrf.mxu0
        %v588 = vadd.f32 %v546, %v587
        %589 = vdwg.mxu0
        %v590 = vld [vmem:[#allocation10] sm:$0xff]
        %v591 = vld [vmem:[#allocation10 + $0x8] sm:$0xff]
        %v592 = vld [vmem:[#allocation10 + $0x10] sm:$0xff]
        %v593 = vld [vmem:[#allocation10 + $0x18] sm:$0xff]
        %v594 = vld [vmem:[%s7] sm:$0x1]
        %v596 = vperm.slane %v594, 0
        %v599 = vsel %vm548, %v532, 0
        %v602 = vsel %vm548, %v533, 0
        %v605 = vsel %vm548, %v534, 0
        %v608 = vsel %vm548, %v535, 0
        %610 = vmatpush.msra.mxu0 0.0
        %611 = vmatpush.msra.mxu0 0.0
        %612 = vmatpush.msra.mxu0 0.0
        %613 = vmatpush.msra.mxu0 0.0
        %614 = vmatpush.msra.mxu0 0.0
        %615 = vmatpush.msra.mxu0 0.0
        %616 = vmatpush.msra.mxu0 0.0
        %617 = vmatpush.msra.mxu0 0.0
        %618 = vmatpush.msra.mxu0 0.0
        %619 = vmatpush.msra.mxu0 0.0
        %620 = vmatpush.msra.mxu0 0.0
        %621 = vmatpush.msra.mxu0 0.0
        %622 = vmatpush.msra.mxu0 %v593
        %623 = vmatpush.msra.mxu0 %v592
        %624 = vmatpush.msra.mxu0 %v591
        %625 = vmatpush.msra.mxu0 %v590
        %626 = vmatmul.f32.gmra.mxu0 %v599
        %v627 = vpop.f32.mrf.mxu0
        %v628 = vadd.f32 %v596, %v627
        %629 = vmatmul.f32.gmra.mxu0 %v602
        %v630 = vpop.f32.mrf.mxu0
        %v631 = vadd.f32 %v596, %v630
        %632 = vmatmul.f32.gmra.mxu0 %v605
        %v633 = vpop.f32.mrf.mxu0
        %v634 = vadd.f32 %v596, %v633
        %635 = vmatmul.f32.gmra.mxu0 %v608
        %v636 = vpop.f32.mrf.mxu0
        %v637 = vadd.f32 %v596, %v636
        %638 = vdwg.mxu0
        %v639 = vld [vmem:[#allocation11] sm:$0xff]
        %v640 = vld [vmem:[#allocation11 + $0x8] sm:$0xff]
        %v641 = vld [vmem:[#allocation11 + $0x10] sm:$0xff]
        %v642 = vld [vmem:[#allocation11 + $0x18] sm:$0xff]
        %v643 = vld [vmem:[%s8] sm:$0x1]
        %v645 = vperm.slane %v643, 0
        %v648 = vsel %vm548, %v536, 0
        %v651 = vsel %vm548, %v537, 0
        %v654 = vsel %vm548, %v538, 0
        %v657 = vsel %vm548, %v539, 0
        %659 = vmatpush.msra.mxu0 0.0
        %660 = vmatpush.msra.mxu0 0.0
        %661 = vmatpush.msra.mxu0 0.0
        %662 = vmatpush.msra.mxu0 0.0
        %663 = vmatpush.msra.mxu0 0.0
        %664 = vmatpush.msra.mxu0 0.0
        %665 = vmatpush.msra.mxu0 0.0
        %666 = vmatpush.msra.mxu0 0.0
        %667 = vmatpush.msra.mxu0 0.0
        %668 = vmatpush.msra.mxu0 0.0
        %669 = vmatpush.msra.mxu0 0.0
        %670 = vmatpush.msra.mxu0 0.0
        %671 = vmatpush.msra.mxu0 %v642
        %672 = vmatpush.msra.mxu0 %v641
        %673 = vmatpush.msra.mxu0 %v640
        %674 = vmatpush.msra.mxu0 %v639
        %675 = vmatmul.f32.gmra.mxu0 %v648
        %v676 = vpop.f32.mrf.mxu0
        %v677 = vadd.f32 %v645, %v676
        %678 = vmatmul.f32.gmra.mxu0 %v651
        %v679 = vpop.f32.mrf.mxu0
        %v680 = vadd.f32 %v645, %v679
        %681 = vmatmul.f32.gmra.mxu0 %v654
        %v682 = vpop.f32.mrf.mxu0
        %v683 = vadd.f32 %v645, %v682
        %684 = vmatmul.f32.gmra.mxu0 %v657
        %v685 = vpop.f32.mrf.mxu0
        %v686 = vadd.f32 %v645, %v685
        %687 = vdwg.mxu0
        %v688 = vmul.f32 %v579, 0.17677669
        %v689 = vmul.f32 %v582, 0.17677669
        %v690 = vmul.f32 %v585, 0.17677669
        %v691 = vmul.f32 %v588, 0.17677669
        %v692 = vpack.c.bf16 %v688, %v688
        %v693 = vpack.c.bf16 %v689, %v689
        %v694 = vpack.c.bf16 %v690, %v690
        %v695 = vpack.c.bf16 %v691, %v691
        %v696 = vpack.c.bf16 %v628, %v628
        %v697 = vpack.c.bf16 %v631, %v631
        %v698 = vpack.c.bf16 %v634, %v634
        %v699 = vpack.c.bf16 %v637, %v637
        %v700 = vpack.c.bf16 %v677, %v677
        %v701 = vpack.c.bf16 %v680, %v680
        %v702 = vpack.c.bf16 %v683, %v683
        %v703 = vpack.c.bf16 %v686, %v686
        %v705 = vsel %vm548, %v692, 0
        %v708 = vsel %vm548, %v696, 0
        %710 = vmatpush.bf16.xpose.msra.mxu0 0
        %711 = vmatpush.bf16.xpose.msra.mxu0 0
        %712 = vmatpush.bf16.xpose.msra.mxu0 0
        %713 = vmatpush.bf16.xpose.msra.mxu0 0
        %714 = vmatpush.bf16.xpose.msra.mxu0 0
        %715 = vmatpush.bf16.xpose.msra.mxu0 0
        %716 = vmatpush.bf16.xpose.msra.mxu0 0
        %717 = vmatpush.bf16.xpose.msra.mxu0 %v708
        %718 = vmatmul.bf16.gmra.mxu0 %v705
        %v719 = vpop.f32.mrf.mxu0
        %v720 = vadd.f32 0.0, %v719
        %v721 = vpop.f32.mrf.mxu0
        %722 = vdwg.mxu0
        %v724 = vsel %vm548, %v693, 0
        %v727 = vsel %vm548, %v697, 0
        %729 = vmatpush.bf16.xpose.msra.mxu0 0
        %730 = vmatpush.bf16.xpose.msra.mxu0 0
        %731 = vmatpush.bf16.xpose.msra.mxu0 0
        %732 = vmatpush.bf16.xpose.msra.mxu0 0
        %733 = vmatpush.bf16.xpose.msra.mxu0 0
        %734 = vmatpush.bf16.xpose.msra.mxu0 0
        %735 = vmatpush.bf16.xpose.msra.mxu0 0
        %736 = vmatpush.bf16.xpose.msra.mxu0 %v727
        %737 = vmatmul.bf16.gmra.mxu0 %v724
        %v738 = vpop.f32.mrf.mxu0
        %v739 = vadd.f32 0.0, %v738
        %v740 = vpop.f32.mrf.mxu0
        %741 = vdwg.mxu0
        %v743 = vsel %vm548, %v694, 0
        %v746 = vsel %vm548, %v698, 0
        %748 = vmatpush.bf16.xpose.msra.mxu0 0
        %749 = vmatpush.bf16.xpose.msra.mxu0 0
        %750 = vmatpush.bf16.xpose.msra.mxu0 0
        %751 = vmatpush.bf16.xpose.msra.mxu0 0
        %752 = vmatpush.bf16.xpose.msra.mxu0 0
        %753 = vmatpush.bf16.xpose.msra.mxu0 0
        %754 = vmatpush.bf16.xpose.msra.mxu0 0
        %755 = vmatpush.bf16.xpose.msra.mxu0 %v746
        %756 = vmatmul.bf16.gmra.mxu0 %v743
        %v757 = vpop.f32.mrf.mxu0
        %v758 = vadd.f32 0.0, %v757
        %v759 = vpop.f32.mrf.mxu0
        %760 = vdwg.mxu0
        %v762 = vsel %vm548, %v695, 0
        %v765 = vsel %vm548, %v699, 0
        %767 = vmatpush.bf16.xpose.msra.mxu0 0
        %768 = vmatpush.bf16.xpose.msra.mxu0 0
        %769 = vmatpush.bf16.xpose.msra.mxu0 0
        %770 = vmatpush.bf16.xpose.msra.mxu0 0
        %771 = vmatpush.bf16.xpose.msra.mxu0 0
        %772 = vmatpush.bf16.xpose.msra.mxu0 0
        %773 = vmatpush.bf16.xpose.msra.mxu0 0
        %774 = vmatpush.bf16.xpose.msra.mxu0 %v765
        %775 = vmatmul.bf16.gmra.mxu0 %v762
        %v776 = vpop.f32.mrf.mxu0
        %v777 = vadd.f32 0.0, %v776
        %v778 = vpop.f32.mrf.mxu0
        %779 = vdwg.mxu0
        %v780 = vlaneseq
        %v781 = vshrl.u32 %v780, 7
        %v782 = vlaneseq
        %v783 = vand.u32 %v782, 127
        %vm784 = vcmp.gt.s32.totalorder %v783, %v781
        %v785 = vsel %vm784, -10000000.0, %v720
        %v786 = vsel %vm784, -10000000.0, %v739
        %v787 = vsel %vm784, -10000000.0, %v758
        %v788 = vsel %vm784, -10000000.0, %v777
        %vm789 = vcmask 64512
        %v790 = vsel %vm789, %v785, -inf
        %791 = vmax.xlane.f32.xlu0 %v790
        %v792 = vpop.xlane.xlu0 %791
        %v793 = vsel %vm789, %v786, -inf
        %794 = vmax.xlane.f32.xlu0 %v793
        %v795 = vpop.xlane.xlu0 %794
        %v796 = vsel %vm789, %v787, -inf
        %797 = vmax.xlane.f32.xlu0 %v796
        %v798 = vpop.xlane.xlu0 %797
        %v799 = vsel %vm789, %v788, -inf
        %800 = vmax.xlane.f32.xlu0 %v799
        %v801 = vpop.xlane.xlu0 %800
        %v802 = vsub.f32 %v785, %v792
        %v803 = vsub.f32 %v786, %v795
        %v804 = vsub.f32 %v787, %v798
        %v805 = vsub.f32 %v788, %v801
        %v806 = vmul.f32 %v802, 1.442695
        %v807 = vpow.pop %v806
        %v808 = vmul.f32 %v803, 1.442695
        %v809 = vpow.pop %v808
        %v810 = vmul.f32 %v804, 1.442695
        %v811 = vpow.pop %v810
        %v812 = vmul.f32 %v805, 1.442695
        %v813 = vpow.pop %v812
        %v814 = vsel %vm789, %v807, 0.0
        %815 = vadd.xlane.f32.xlu0 %v814
        %v816 = vpop.xlane.xlu0 %815
        %v817 = vsel %vm789, %v809, 0.0
        %818 = vadd.xlane.f32.xlu0 %v817
        %v819 = vpop.xlane.xlu0 %818
        %v820 = vsel %vm789, %v811, 0.0
        %821 = vadd.xlane.f32.xlu0 %v820
        %v822 = vpop.xlane.xlu0 %821
        %v823 = vsel %vm789, %v813, 0.0
        %824 = vadd.xlane.f32.xlu0 %v823
        %v825 = vpop.xlane.xlu0 %824
        %v826 = vrcp.pop %v816
        %v827 = vrcp.pop %v819
        %v828 = vrcp.pop %v822
        %v829 = vrcp.pop %v825
        %v830 = vmul.f32 %v807, %v826
        %v831 = vmul.f32 %v809, %v827
        %v832 = vmul.f32 %v811, %v828
        %v833 = vmul.f32 %v813, %v829
        %v834 = vpack.c.bf16 %v830, %v830
        %v835 = vpack.c.bf16 %v831, %v831
        %v836 = vpack.c.bf16 %v832, %v832
        %v837 = vpack.c.bf16 %v833, %v833
        %v839 = vsel %vm789, %v834, 0
        %vm841 = vcmask 1043456
        %v843 = vsel %vm841, %v700, 0
        %845 = vmatpush.bf16.msra.mxu0 0
        %846 = vmatpush.bf16.msra.mxu0 0
        %847 = vmatpush.bf16.msra.mxu0 0
        %848 = vmatpush.bf16.msra.mxu0 0
        %849 = vmatpush.bf16.msra.mxu0 0
        %850 = vmatpush.bf16.msra.mxu0 0
        %851 = vmatpush.bf16.msra.mxu0 0
        %852 = vmatpush.bf16.msra.mxu0 %v843
        %853 = vmatmul.bf16.gmra.mxu0 %v839
        %v854 = vpop.f32.mrf.mxu0
        %v855 = vadd.f32 0.0, %v854
        %v856 = vpop.f32.mrf.mxu0
        %857 = vdwg.mxu0
        %v859 = vsel %vm789, %v835, 0
        %v862 = vsel %vm841, %v701, 0
        %864 = vmatpush.bf16.msra.mxu0 0
        %865 = vmatpush.bf16.msra.mxu0 0
        %866 = vmatpush.bf16.msra.mxu0 0
        %867 = vmatpush.bf16.msra.mxu0 0
        %868 = vmatpush.bf16.msra.mxu0 0
        %869 = vmatpush.bf16.msra.mxu0 0
        %870 = vmatpush.bf16.msra.mxu0 0
        %871 = vmatpush.bf16.msra.mxu0 %v862
        %872 = vmatmul.bf16.gmra.mxu0 %v859
        %v873 = vpop.f32.mrf.mxu0
        %v874 = vadd.f32 0.0, %v873
        %v875 = vpop.f32.mrf.mxu0
        %876 = vdwg.mxu0
        %v878 = vsel %vm789, %v836, 0
        %v881 = vsel %vm841, %v702, 0
        %883 = vmatpush.bf16.msra.mxu0 0
        %884 = vmatpush.bf16.msra.mxu0 0
        %885 = vmatpush.bf16.msra.mxu0 0
        %886 = vmatpush.bf16.msra.mxu0 0
        %887 = vmatpush.bf16.msra.mxu0 0
        %888 = vmatpush.bf16.msra.mxu0 0
        %889 = vmatpush.bf16.msra.mxu0 0
        %890 = vmatpush.bf16.msra.mxu0 %v881
        %891 = vmatmul.bf16.gmra.mxu0 %v878
        %v892 = vpop.f32.mrf.mxu0
        %v893 = vadd.f32 0.0, %v892
        %v894 = vpop.f32.mrf.mxu0
        %895 = vdwg.mxu0
        %v897 = vsel %vm789, %v837, 0
        %v900 = vsel %vm841, %v703, 0
        %902 = vmatpush.bf16.msra.mxu0 0
        %903 = vmatpush.bf16.msra.mxu0 0
        %904 = vmatpush.bf16.msra.mxu0 0
        %905 = vmatpush.bf16.msra.mxu0 0
        %906 = vmatpush.bf16.msra.mxu0 0
        %907 = vmatpush.bf16.msra.mxu0 0
        %908 = vmatpush.bf16.msra.mxu0 0
        %909 = vmatpush.bf16.msra.mxu0 %v900
        %910 = vmatmul.bf16.gmra.mxu0 %v897
        %v911 = vpop.f32.mrf.mxu0
        %v912 = vadd.f32 0.0, %v911
        %v913 = vpop.f32.mrf.mxu0
        %914 = vdwg.mxu0
        %915 = vst.msk [vmem:[%s514] sm:$0xff] %vm548, %v855
        %916 = vst.msk [vmem:[%s514 + $0x8] sm:$0xff] %vm548, %v874
        %917 = vst.msk [vmem:[%s514 + $0x10] sm:$0xff] %vm548, %v893
        %918 = vst.msk [vmem:[%s514 + $0x18] sm:$0xff] %vm548, %v912
        %919 = vxpose.xlu0.b32.start [1/16] %v830, 128
        %920 = vxpose.xlu0.b32.cont [2/16] 0.0, 128
        %921 = vxpose.xlu0.b32.cont [3/16] 0.0, 128
        %922 = vxpose.xlu0.b32.cont [4/16] 0.0, 128
        %923 = vxpose.xlu0.b32.cont [5/16] 0.0, 128
        %924 = vxpose.xlu0.b32.cont [6/16] 0.0, 128
        %925 = vxpose.xlu0.b32.cont [7/16] 0.0, 128
        %926 = vxpose.xlu0.b32.cont [8/16] 0.0, 128
        %927 = vxpose.xlu0.b32.cont [9/16] 0.0, 128
        %928 = vxpose.xlu0.b32.cont [10/16] 0.0, 128
        %929 = vxpose.xlu0.b32.cont [11/16] 0.0, 128
        %930 = vxpose.xlu0.b32.cont [12/16] 0.0, 128
        %931 = vxpose.xlu0.b32.cont [13/16] 0.0, 128
        %932 = vxpose.xlu0.b32.cont [14/16] 0.0, 128
        %933 = vxpose.xlu0.b32.cont [15/16] 0.0, 128
        %934 = vxpose.xlu0.b32.end [16/16] 0.0, 128
        %v935 = vpop.trf.xlu0
        %v936 = vpop.trf.xlu0
        %v937 = vpop.trf.xlu0
        %v938 = vpop.trf.xlu0
        %v939 = vpop.trf.xlu0
        %v940 = vpop.trf.xlu0
        %v941 = vpop.trf.xlu0
        %v942 = vpop.trf.xlu0
        %v943 = vpop.trf.xlu0
        %v944 = vpop.trf.xlu0
        %v945 = vpop.trf.xlu0
        %v946 = vpop.trf.xlu0
        %v947 = vpop.trf.xlu0
        %v948 = vpop.trf.xlu0
        %v949 = vpop.trf.xlu0
        %v950 = vpop.trf.xlu0
        %951 = vxpose.xlu0.b32.start [1/16] %v831, 128
        %952 = vxpose.xlu0.b32.cont [2/16] 0.0, 128
        %953 = vxpose.xlu0.b32.cont [3/16] 0.0, 128
        %954 = vxpose.xlu0.b32.cont [4/16] 0.0, 128
        %955 = vxpose.xlu0.b32.cont [5/16] 0.0, 128
        %956 = vxpose.xlu0.b32.cont [6/16] 0.0, 128
        %957 = vxpose.xlu0.b32.cont [7/16] 0.0, 128
        %958 = vxpose.xlu0.b32.cont [8/16] 0.0, 128
        %959 = vxpose.xlu0.b32.cont [9/16] 0.0, 128
        %960 = vxpose.xlu0.b32.cont [10/16] 0.0, 128
        %961 = vxpose.xlu0.b32.cont [11/16] 0.0, 128
        %962 = vxpose.xlu0.b32.cont [12/16] 0.0, 128
        %963 = vxpose.xlu0.b32.cont [13/16] 0.0, 128
        %964 = vxpose.xlu0.b32.cont [14/16] 0.0, 128
        %965 = vxpose.xlu0.b32.cont [15/16] 0.0, 128
        %966 = vxpose.xlu0.b32.end [16/16] 0.0, 128
        %v967 = vpop.trf.xlu0
        %v968 = vpop.trf.xlu0
        %v969 = vpop.trf.xlu0
        %v970 = vpop.trf.xlu0
        %v971 = vpop.trf.xlu0
        %v972 = vpop.trf.xlu0
        %v973 = vpop.trf.xlu0
        %v974 = vpop.trf.xlu0
        %v975 = vpop.trf.xlu0
        %v976 = vpop.trf.xlu0
        %v977 = vpop.trf.xlu0
        %v978 = vpop.trf.xlu0
        %v979 = vpop.trf.xlu0
        %v980 = vpop.trf.xlu0
        %v981 = vpop.trf.xlu0
        %v982 = vpop.trf.xlu0
        %983 = vxpose.xlu0.b32.start [1/16] %v832, 128
        %984 = vxpose.xlu0.b32.cont [2/16] 0.0, 128
        %985 = vxpose.xlu0.b32.cont [3/16] 0.0, 128
        %986 = vxpose.xlu0.b32.cont [4/16] 0.0, 128
        %987 = vxpose.xlu0.b32.cont [5/16] 0.0, 128
        %988 = vxpose.xlu0.b32.cont [6/16] 0.0, 128
        %989 = vxpose.xlu0.b32.cont [7/16] 0.0, 128
        %990 = vxpose.xlu0.b32.cont [8/16] 0.0, 128
        %991 = vxpose.xlu0.b32.cont [9/16] 0.0, 128
        %992 = vxpose.xlu0.b32.cont [10/16] 0.0, 128
        %993 = vxpose.xlu0.b32.cont [11/16] 0.0, 128
        %994 = vxpose.xlu0.b32.cont [12/16] 0.0, 128
        %995 = vxpose.xlu0.b32.cont [13/16] 0.0, 128
        %996 = vxpose.xlu0.b32.cont [14/16] 0.0, 128
        %997 = vxpose.xlu0.b32.cont [15/16] 0.0, 128
        %998 = vxpose.xlu0.b32.end [16/16] 0.0, 128
        %v999 = vpop.trf.xlu0
        %v1000 = vpop.trf.xlu0
        %v1001 = vpop.trf.xlu0
        %v1002 = vpop.trf.xlu0
        %v1003 = vpop.trf.xlu0
        %v1004 = vpop.trf.xlu0
        %v1005 = vpop.trf.xlu0
        %v1006 = vpop.trf.xlu0
        %v1007 = vpop.trf.xlu0
        %v1008 = vpop.trf.xlu0
        %v1009 = vpop.trf.xlu0
        %v1010 = vpop.trf.xlu0
        %v1011 = vpop.trf.xlu0
        %v1012 = vpop.trf.xlu0
        %v1013 = vpop.trf.xlu0
        %v1014 = vpop.trf.xlu0
        %1015 = vxpose.xlu0.b32.start [1/16] %v833, 128
        %1016 = vxpose.xlu0.b32.cont [2/16] 0.0, 128
        %1017 = vxpose.xlu0.b32.cont [3/16] 0.0, 128
        %1018 = vxpose.xlu0.b32.cont [4/16] 0.0, 128
        %1019 = vxpose.xlu0.b32.cont [5/16] 0.0, 128
        %1020 = vxpose.xlu0.b32.cont [6/16] 0.0, 128
        %1021 = vxpose.xlu0.b32.cont [7/16] 0.0, 128
        %1022 = vxpose.xlu0.b32.cont [8/16] 0.0, 128
        %1023 = vxpose.xlu0.b32.cont [9/16] 0.0, 128
        %1024 = vxpose.xlu0.b32.cont [10/16] 0.0, 128
        %1025 = vxpose.xlu0.b32.cont [11/16] 0.0, 128
        %1026 = vxpose.xlu0.b32.cont [12/16] 0.0, 128
        %1027 = vxpose.xlu0.b32.cont [13/16] 0.0, 128
        %1028 = vxpose.xlu0.b32.cont [14/16] 0.0, 128
        %1029 = vxpose.xlu0.b32.cont [15/16] 0.0, 128
        %1030 = vxpose.xlu0.b32.end [16/16] 0.0, 128
        %v1031 = vpop.trf.xlu0
        %v1032 = vpop.trf.xlu0
        %v1033 = vpop.trf.xlu0
        %v1034 = vpop.trf.xlu0
        %v1035 = vpop.trf.xlu0
        %v1036 = vpop.trf.xlu0
        %v1037 = vpop.trf.xlu0
        %v1038 = vpop.trf.xlu0
        %v1039 = vpop.trf.xlu0
        %v1040 = vpop.trf.xlu0
        %v1041 = vpop.trf.xlu0
        %v1042 = vpop.trf.xlu0
        %v1043 = vpop.trf.xlu0
        %v1044 = vpop.trf.xlu0
        %v1045 = vpop.trf.xlu0
        %v1046 = vpop.trf.xlu0
        %1047 = vst.msk [vmem:[%s521] sm:$0xff] %vm789, %v935
        %1048 = vst.msk [vmem:[%s521 + $0x8] sm:$0xff] %vm789, %v967
        %1049 = vst.msk [vmem:[%s521 + $0x10] sm:$0xff] %vm789, %v999
        %1050 = vst.msk [vmem:[%s521 + $0x18] sm:$0xff] %vm789, %v1031
        %s1051 = sand.u32 %s248, 1
        %s1052 = scalar_lea.sflag [#allocation4], %s1051
        %s1053 = sand.u32 %s248, 1
        %s1054 = smul.addr %s1053, 32
        %s1055 = scalar_lea.vmem [#allocation13], %s1054
        %s1056 = sand.u32 %s274, 1
        %s1057 = scalar_lea.sflag [#allocation15], %s1056
        %s1058 = sand.u32 %s274, 1
        %s1059 = smul.addr %s1058, 32
        %s1060 = scalar_lea.vmem [#allocation14], %s1059
        // Predicated region
        $region81: #{causal_scaled_dot_attention.1} parent=55 // pred_check
          %p1061 = pneg %p258
        $region82: #{causal_scaled_dot_attention.1} parent=55 // pred_check_branch
          %1063 = sbr.rel (%p1061) target = $region84
        $region83: #{causal_scaled_dot_attention.1} parent=55 // pred_region
          %s1064 = smul.u32 4, %s36
          %1066 = vsyncadd %s1052, 0
          %s1067 = smul.addr %s1064, 8
          %s1068 = scalar_lea.hbm %s9, %s1067
          %s1069 = sshll.u32 %s1055, 4
          %s1070 = int_to_ptr.vmem [resolvable:$true] %s1069
          %s1071 = sshll.u32 %s1068, 4
          %s1072 = int_to_ptr.hbm [resolvable:$true] %s1071
          %1077 = dma.vmem_to_hbm [thread:$0]  %s1070, 512, %s1072, %s1052, 128, 128, 8
        $region84: #{causal_scaled_dot_attention.1} parent=55 // pred_fallthru
          _
        // Predicated region
        $region85: #{causal_scaled_dot_attention.1} parent=55 // pred_check
          %p1078 = pneg %p284
        $region86: #{causal_scaled_dot_attention.1} parent=55 // pred_check_branch
          %1080 = sbr.rel (%p1078) target = $region88
        $region87: #{causal_scaled_dot_attention.1} parent=55 // pred_region
          %s1081 = smul.u32 4, %s36
          %1083 = vsyncadd %s1057, 0
          %s1084 = smul.addr %s1081, 8
          %s1085 = scalar_lea.hbm %s10, %s1084
          %s1086 = sshll.u32 %s1060, 4
          %s1087 = int_to_ptr.vmem [resolvable:$true] %s1086
          %s1088 = sshll.u32 %s1085, 4
          %s1089 = int_to_ptr.hbm [resolvable:$true] %s1088
          %1094 = dma.vmem_to_hbm [thread:$0]  %s1087, 512, %s1089, %s1057, 128, 128, 8
        $region88: #{causal_scaled_dot_attention.1} parent=55 // pred_fallthru
          _
      $region56: #{causal_scaled_dot_attention.1} parent=5 // pred_fallthru
        _
      %p1095 = scmp.le.s32.totalorder 2, %s31
      // Predicated region
      $region89: #{causal_scaled_dot_attention.1} parent=5 // pred_check
        %p1096 = pneg %p1095
      $region90: #{causal_scaled_dot_attention.1} parent=5 // pred_check_branch
        %1098 = sbr.rel (%p1096) target = $region92
      $region91: #{causal_scaled_dot_attention.1} parent=5 // pred_region
        %s1099 = ssub.s32 %s31, 2
        // Predicated region
        $region93: #{causal_scaled_dot_attention.1} parent=91 // pred_check
          %p1100 = pneg %p264
        $region94: #{causal_scaled_dot_attention.1} parent=91 // pred_check_branch
          %1102 = sbr.rel (%p1100) target = $region96
        $region95: #{causal_scaled_dot_attention.1} parent=91 // pred_region
          %s1103 = sand.u32 %s249, 1
          %s1104 = scalar_lea.sflag [#allocation4], %s1103
          %s1105 = sand.u32 %s249, 1
          %s1106 = smul.addr %s1105, 32
          %s1107 = scalar_lea.vmem [#allocation13], %s1106
          %1109 = dma.done %s1104, 512
        $region96: #{causal_scaled_dot_attention.1} parent=91 // pred_fallthru
          _
        // Predicated region
        $region97: #{causal_scaled_dot_attention.1} parent=91 // pred_check
          %p1110 = pneg %p290
        $region98: #{causal_scaled_dot_attention.1} parent=91 // pred_check_branch
          %1112 = sbr.rel (%p1110) target = $region100
        $region99: #{causal_scaled_dot_attention.1} parent=91 // pred_region
          %s1113 = sand.u32 %s275, 1
          %s1114 = scalar_lea.sflag [#allocation15], %s1113
          %s1115 = sand.u32 %s275, 1
          %s1116 = smul.addr %s1115, 32
          %s1117 = scalar_lea.vmem [#allocation14], %s1116
          %1119 = dma.done %s1114, 512
        $region100: #{causal_scaled_dot_attention.1} parent=91 // pred_fallthru
          _
      $region92: #{causal_scaled_dot_attention.1} parent=5 // pred_fallthru
        _
    $region6: #{causal_scaled_dot_attention.1} parent=1 // loop_footer
      %s35 = sadd.s32 1, %s31
    $region7: #{causal_scaled_dot_attention.1} parent=1 // loop_footer_branch
      %30 = sbr.rel target = $region3
    $region8: #{causal_scaled_dot_attention.1} parent=1 // loop_exit
      _
    %1120 = vsyncpa [#allocation3], 1
    %s1121 = scalar_lea.sflag [#allocation3], 1
    %1122 = vsyncpa %s1121, 1
    %1123 = vsyncpa [#allocation6], 1
    %s1124 = scalar_lea.sflag [#allocation6], 1
    %1125 = vsyncpa %s1124, 1
    %1126 = vsyncpa [#allocation9], 1
    %1127 = vsyncpa [#allocation12], 1
    %1128 = vsyncpa [#allocation4], 1
    %s1129 = scalar_lea.sflag [#allocation4], 1
    %1130 = vsyncpa %s1129, 1
    %1131 = vsyncpa [#allocation15], 1
    %s1132 = scalar_lea.sflag [#allocation15], 1
    %1133 = vsyncpa %s1132, 1

</llo_original>
